<compile_context>
chip_gen: v7x
topology: tpu7x:2x2x1
jax: 0.10.0
libtpu: 0.0.40
codegen_flags: <defaults>
</compile_context>

<pallas_src>
import jax
import jax.numpy as jnp
from jax.experimental import pallas as pl
from jax.experimental.pallas import tpu as pltpu


def _round_up(x, m):
    return ((x + m - 1) // m) * m


def _num_tensorcores():
    """Best-effort TensorCore count per chip (v7x has 2; v5e/v6e have 1)."""
    try:
        kind = jax.devices()[0].device_kind.lower()
    except Exception:
        return 1
    return 2 if "v7" in kind else 1


# -----------------------------------------------------------------------------
# Kernel: fused 3-layer MLP (matmuls on MXU, bias/ReLU on VPU, tanh on EUP)
# -----------------------------------------------------------------------------
def gen_kernel(x_ref, w1_ref, b1_ref, w2_ref, b2_ref, w3_ref, b3_ref, o_ref):
    # Layer 1: cast the f32 x tile to the weight dtype in-kernel (VPU work that
    # hides under the MXU), matmul with f32 accumulation, f32 bias + ReLU.
    x = x_ref[...].astype(w1_ref.dtype)
    h1 = jnp.dot(x, w1_ref[...], preferred_element_type=jnp.float32)
    h1 = jnp.maximum(h1 + b1_ref[...], 0.0)
    # Layer 2
    h2 = jnp.dot(h1.astype(w2_ref.dtype), w2_ref[...],
                 preferred_element_type=jnp.float32)
    h2 = jnp.maximum(h2 + b2_ref[...], 0.0)
    # Layer 3 + Tanh (tanh lowers to the otherwise-idle EUP slot)
    h3 = jnp.dot(h2.astype(w3_ref.dtype), w3_ref[...],
                 preferred_element_type=jnp.float32)
    o_ref[...] = jnp.tanh(h3 + b3_ref[...]).astype(o_ref.dtype)


# -----------------------------------------------------------------------------
# One-time parameter preparation (NOT per forward call)
# -----------------------------------------------------------------------------
def prepare_params(params, *, weight_dtype=jnp.bfloat16, lane_pad=128):
    """Cast weights to bf16 (biases stay f32) and pad layer-3 features to a
    multiple of 128 so the kernel's output stores are lane-dense. The padded
    columns have zero weight/bias, so tanh(0) = 0 there. Doing this once at
    init removes the per-call convert/pad launches that would otherwise
    re-read every f32 weight from HBM on each forward pass."""
    w3, b3 = params["w3"], params["b3"]
    d_out = w3.shape[1]
    d_out_p = _round_up(d_out, lane_pad)
    if d_out_p != d_out:
        pad = d_out_p - d_out
        w3 = jnp.pad(w3, ((0, 0), (0, pad)))
        b3 = jnp.pad(b3, ((0, 0), (0, pad)))
    prepared = {
        "w1": params["w1"].astype(weight_dtype),
        "b1": params["b1"].astype(jnp.float32),
        "w2": params["w2"].astype(weight_dtype),
        "b2": params["b2"].astype(jnp.float32),
        "w3": w3.astype(weight_dtype),
        "b3": b3.astype(jnp.float32),
    }
    return prepared, d_out


# -----------------------------------------------------------------------------
# Forward wrapper
# -----------------------------------------------------------------------------
def gen_forward(x, prepared, d_out, *, tb=None, out_dtype=None,
                slice_output=True):
    """Generator forward pass: one fused Pallas kernel over batch tiles.

    x: [B, input_size] float32 (cast to bf16 inside the kernel).
    prepared, d_out: from prepare_params().
    """
    w1, b1 = prepared["w1"], prepared["b1"]
    w2, b2 = prepared["w2"], prepared["b2"]
    w3, b3 = prepared["w3"], prepared["b3"]

    B, D_in = x.shape
    H2 = w1.shape[1]
    H = w2.shape[1]
    D_out_p = w3.shape[1]
    out_dtype = x.dtype if out_dtype is None else out_dtype

    # ---- Batch tile: chip-aware ---------------------------------------------
    # v5e/v6e (single TensorCore): the grid is a sequential loop, so extra
    # steps are pure ~600-cycle overhead -> one big tile. v7x (2 TCs): an even
    # number of grid steps so both cores get balanced work on the "parallel"
    # batch axis. Rows rounded to 16 (full bf16 sublane packing) when B > 16.
    if tb is None:
        if _num_tensorcores() > 1 and B > 32:
            steps = max(2, 2 * pl.cdiv(B, 2 * 512))   # even step count, <=512 rows/step
            tb = _round_up(pl.cdiv(B, steps), 16)
        elif B > 16:
            tb = min(_round_up(B, 16), 512)
        else:
            tb = _round_up(B, 8)                       # tiny batch: one exact tile
    grid = (pl.cdiv(B, tb),)

    # ---- VMEM budget ---------------------------------------------------------
    # Weights single-buffered (grid-invariant), x/out tiles double-buffered,
    # plus resident f32 intermediates h1/h2/h3. Cap at 48 MiB to keep headroom
    # inside v7x's 64 MiB physical VMEM (Mosaic internal scratch, etc.).
    weight_bytes = sum(int(a.size) * a.dtype.itemsize
                       for a in (w1, b1, w2, b2, w3, b3))
    act_bytes = (2 * tb * D_in * x.dtype.itemsize                       # x tiles
                 + 2 * tb * D_out_p * jnp.dtype(out_dtype).itemsize     # out tiles
                 + tb * (H2 + H + D_out_p) * 4)                         # f32 h1/h2/h3
    vmem_limit = int(min(48 << 20,
                         max(32 << 20, weight_bytes + act_bytes + (4 << 20))))

    cost = pl.CostEstimate(
        flops=2 * B * (D_in * H2 + H2 * H + H * D_out_p),
        transcendentals=B * D_out_p,
        bytes_accessed=(weight_bytes
                        + int(x.size) * x.dtype.itemsize
                        + B * D_out_p * jnp.dtype(out_dtype).itemsize),
    )

    def const_spec(shape):
        # Grid-invariant operand (index_map always (0,0)): single-buffer it —
        # it is never re-fetched across steps, and this halves its VMEM use.
        return pl.BlockSpec(shape, lambda i: (0, 0),
                            pipeline_mode=pl.Buffered(1))

    out = pl.pallas_call(
        gen_kernel,
        out_shape=jax.ShapeDtypeStruct((B, D_out_p), out_dtype),
        grid_spec=pltpu.PrefetchScalarGridSpec(
            num_scalar_prefetch=0,
            grid=grid,
            in_specs=[
                pl.BlockSpec((tb, D_in), lambda i: (i, 0)),   # x batch tile
                const_spec(w1.shape), const_spec(b1.shape),
                const_spec(w2.shape), const_spec(b2.shape),
                const_spec(w3.shape), const_spec(b3.shape),
            ],
            out_specs=pl.BlockSpec((tb, D_out_p), lambda i: (i, 0)),
        ),
        compiler_params=pltpu.CompilerParams(
            dimension_semantics=("parallel",),
            vmem_limit_bytes=vmem_limit,
        ),
        cost_estimate=cost,
    )(x, w1, b1, w2, b2, w3, b3)

    # Padded columns are exactly tanh(0) = 0. Slice only if the caller needs
    # the exact width; heavy consumers should pass slice_output=False and
    # slice (or ignore the pad) downstream so XLA can fuse / skip the copy.
    if slice_output and D_out_p != d_out:
        out = out[:, :d_out]
    return out


# -----------------------------------------------------------------------------
# Init + reference
# -----------------------------------------------------------------------------
def init_params(key, input_size, hidden_size, output_size):
    """Deterministic init mimicking nn.Linear default (uniform +/- 1/sqrt(fan_in))."""
    dims = [
        (input_size, hidden_size * 2),
        (hidden_size * 2, hidden_size),
        (hidden_size, output_size),
    ]
    params = {}
    for idx, (fan_in, fan_out) in enumerate(dims, start=1):
        key, kw, kb = jax.random.split(key, 3)
        bound = 1.0 / jnp.sqrt(float(fan_in))
        params[f"w{idx}"] = jax.random.uniform(
            kw, (fan_in, fan_out), jnp.float32, minval=-bound, maxval=bound)
        params[f"b{idx}"] = jax.random.uniform(
            kb, (1, fan_out), jnp.float32, minval=-bound, maxval=bound)
    return params


def gen_reference(x, params):
    """Reference emulating the kernel's bf16 operand precision (f32 accumulate)."""
    def bf(a):
        return a.astype(jnp.bfloat16).astype(jnp.float32)

    h1 = jnp.maximum(bf(x) @ bf(params["w1"]) + params["b1"], 0.0)
    h2 = jnp.maximum(bf(h1) @ bf(params["w2"]) + params["b2"], 0.0)
    return jnp.tanh(bf(h2) @ bf(params["w3"]) + params["b3"])


if __name__ == "__main__":
    key = jax.random.PRNGKey(0)
    batch = 8
    input_size = 32     # latent dim
    hidden_size = 64    # -> hidden*2 = 128
    output_size = 100   # not 128-aligned on purpose: exercises lane padding

    key, kx, kp = jax.random.split(key, 3)
    x = jax.random.normal(kx, (batch, input_size), jnp.float32)
    params = init_params(kp, input_size, hidden_size, output_size)

    # One-time preparation (bf16 cast + lane padding) — NOT per forward call.
    prepared, d_out = prepare_params(params)
    prepared = jax.block_until_ready(prepared)

    out = gen_forward(x, prepared, d_out)
    out = jax.block_until_ready(out)

    ref = gen_reference(x, params)
    assert out.shape == (batch, output_size)
    assert jnp.allclose(out, ref, atol=2e-2, rtol=2e-2), "mismatch vs reference"

    print("KERNEL_OK")
</pallas_src>

<mosaic_0001>
module attributes {stable_mosaic.version = 11 : i64} {
  func.func @gen_kernel(%arg0: i32, %arg1: memref<8x32xf32, #tpu.memory_space<vmem>>, %arg2: memref<32x128xbf16, #tpu.memory_space<vmem>>, %arg3: memref<1x128xf32, #tpu.memory_space<vmem>>, %arg4: memref<128x64xbf16, #tpu.memory_space<vmem>>, %arg5: memref<1x64xf32, #tpu.memory_space<vmem>>, %arg6: memref<64x128xbf16, #tpu.memory_space<vmem>>, %arg7: memref<1x128xf32, #tpu.memory_space<vmem>>, %arg8: memref<8x128xf32, #tpu.memory_space<vmem>>) attributes {dimension_semantics = [#tpu.dimension_semantics<parallel>], iteration_bounds = array<i64: 1>, scalar_prefetch = 0 : i64, scratch_operands = 0 : i64, tpu.core_type = #tpu.core_type<tc>, window_params = [{transform_indices = @transform_0, window_bounds = array<i64: 8, 32>}, {pipeline_mode = #tpu.pipeline_mode<synchronous>, transform_indices = @transform_1, window_bounds = array<i64: 32, 128>}, {pipeline_mode = #tpu.pipeline_mode<synchronous>, transform_indices = @transform_2, window_bounds = array<i64: 1, 128>}, {pipeline_mode = #tpu.pipeline_mode<synchronous>, transform_indices = @transform_3, window_bounds = array<i64: 128, 64>}, {pipeline_mode = #tpu.pipeline_mode<synchronous>, transform_indices = @transform_4, window_bounds = array<i64: 1, 64>}, {pipeline_mode = #tpu.pipeline_mode<synchronous>, transform_indices = @transform_5, window_bounds = array<i64: 64, 128>}, {pipeline_mode = #tpu.pipeline_mode<synchronous>, transform_indices = @transform_6, window_bounds = array<i64: 1, 128>}, {transform_indices = @transform_7, window_bounds = array<i64: 8, 128>}]} {
    %c0 = arith.constant 0 : index
    %c0_0 = arith.constant 0 : index
    %0 = vector.load %arg1[%c0, %c0_0] : memref<8x32xf32, #tpu.memory_space<vmem>>, vector<8x32xf32>
    %1 = arith.truncf %0 : vector<8x32xf32> to vector<8x32xbf16>
    %c0_1 = arith.constant 0 : index
    %c0_2 = arith.constant 0 : index
    %2 = vector.load %arg2[%c0_1, %c0_2] : memref<32x128xbf16, #tpu.memory_space<vmem>>, vector<32x128xbf16>
    %cst = arith.constant dense<0.000000e+00> : vector<8x128xf32>
    %3 = tpu.matmul %1, %2, %cst {dimension_numbers = #tpu.dot_dimension_numbers<[1], [0], [0], [1], [0, 0, 1, 1], [], []>} : vector<8x32xbf16>, vector<32x128xbf16>, vector<8x128xf32> -> vector<8x128xf32>
    %c0_3 = arith.constant 0 : index
    %c0_4 = arith.constant 0 : index
    %4 = vector.load %arg3[%c0_3, %c0_4] : memref<1x128xf32, #tpu.memory_space<vmem>>, vector<1x128xf32>
    %5 = vector.broadcast %4 : vector<1x128xf32> to vector<8x128xf32>
    %6 = arith.addf %3, %5 : vector<8x128xf32>
    %cst_5 = arith.constant 0.000000e+00 : f32
    %7 = vector.broadcast %cst_5 : f32 to vector<8x128xf32>
    %8 = arith.maximumf %6, %7 : vector<8x128xf32>
    %9 = arith.truncf %8 : vector<8x128xf32> to vector<8x128xbf16>
    %c0_6 = arith.constant 0 : index
    %c0_7 = arith.constant 0 : index
    %10 = vector.load %arg4[%c0_6, %c0_7] : memref<128x64xbf16, #tpu.memory_space<vmem>>, vector<128x64xbf16>
    %cst_8 = arith.constant dense<0.000000e+00> : vector<8x64xf32>
    %11 = tpu.matmul %9, %10, %cst_8 {dimension_numbers = #tpu.dot_dimension_numbers<[1], [0], [0], [1], [0, 0, 1, 1], [], []>} : vector<8x128xbf16>, vector<128x64xbf16>, vector<8x64xf32> -> vector<8x64xf32>
    %c0_9 = arith.constant 0 : index
    %c0_10 = arith.constant 0 : index
    %12 = vector.load %arg5[%c0_9, %c0_10] : memref<1x64xf32, #tpu.memory_space<vmem>>, vector<1x64xf32>
    %13 = vector.broadcast %12 : vector<1x64xf32> to vector<8x64xf32>
    %14 = arith.addf %11, %13 : vector<8x64xf32>
    %cst_11 = arith.constant 0.000000e+00 : f32
    %15 = vector.broadcast %cst_11 : f32 to vector<8x64xf32>
    %16 = arith.maximumf %14, %15 : vector<8x64xf32>
    %17 = arith.truncf %16 : vector<8x64xf32> to vector<8x64xbf16>
    %c0_12 = arith.constant 0 : index
    %c0_13 = arith.constant 0 : index
    %18 = vector.load %arg6[%c0_12, %c0_13] : memref<64x128xbf16, #tpu.memory_space<vmem>>, vector<64x128xbf16>
    %cst_14 = arith.constant dense<0.000000e+00> : vector<8x128xf32>
    %19 = tpu.matmul %17, %18, %cst_14 {dimension_numbers = #tpu.dot_dimension_numbers<[1], [0], [0], [1], [0, 0, 1, 1], [], []>} : vector<8x64xbf16>, vector<64x128xbf16>, vector<8x128xf32> -> vector<8x128xf32>
    %c0_15 = arith.constant 0 : index
    %c0_16 = arith.constant 0 : index
    %20 = vector.load %arg7[%c0_15, %c0_16] : memref<1x128xf32, #tpu.memory_space<vmem>>, vector<1x128xf32>
    %21 = vector.broadcast %20 : vector<1x128xf32> to vector<8x128xf32>
    %22 = arith.addf %19, %21 : vector<8x128xf32>
    %23 = math.tanh %22 : vector<8x128xf32>
    %c0_17 = arith.constant 0 : index
    %c0_18 = arith.constant 0 : index
    %24 = vector.load %arg8[%c0_17, %c0_18] : memref<8x128xf32, #tpu.memory_space<vmem>>, vector<8x128xf32>
    tpu.vector_store %arg8[%c0_17, %c0_18], %23 {strides = array<i32>} : memref<8x128xf32, #tpu.memory_space<vmem>>, vector<8x128xf32>,
    return
  }
  func.func @transform_0(%arg0: i32) -> (i32, i32) {
    %c0_i32 = arith.constant 0 : i32
    %c0_i32_0 = arith.constant 0 : i32
    return %arg0, %c0_i32 : i32, i32
  }
  func.func @transform_1(%arg0: i32) -> (i32, i32) {
    %c0_i32 = arith.constant 0 : i32
    %c0_i32_0 = arith.constant 0 : i32
    %c0_i32_1 = arith.constant 0 : i32
    return %c0_i32, %c0_i32_0 : i32, i32
  }
  func.func @transform_2(%arg0: i32) -> (i32, i32) {
    %c0_i32 = arith.constant 0 : i32
    %c0_i32_0 = arith.constant 0 : i32
    %c0_i32_1 = arith.constant 0 : i32
    return %c0_i32, %c0_i32_0 : i32, i32
  }
  func.func @transform_3(%arg0: i32) -> (i32, i32) {
    %c0_i32 = arith.constant 0 : i32
    %c0_i32_0 = arith.constant 0 : i32
    %c0_i32_1 = arith.constant 0 : i32
    return %c0_i32, %c0_i32_0 : i32, i32
  }
  func.func @transform_4(%arg0: i32) -> (i32, i32) {
    %c0_i32 = arith.constant 0 : i32
    %c0_i32_0 = arith.constant 0 : i32
    %c0_i32_1 = arith.constant 0 : i32
    return %c0_i32, %c0_i32_0 : i32, i32
  }
  func.func @transform_5(%arg0: i32) -> (i32, i32) {
    %c0_i32 = arith.constant 0 : i32
    %c0_i32_0 = arith.constant 0 : i32
    %c0_i32_1 = arith.constant 0 : i32
    return %c0_i32, %c0_i32_0 : i32, i32
  }
  func.func @transform_6(%arg0: i32) -> (i32, i32) {
    %c0_i32 = arith.constant 0 : i32
    %c0_i32_0 = arith.constant 0 : i32
    %c0_i32_1 = arith.constant 0 : i32
    return %c0_i32, %c0_i32_0 : i32, i32
  }
  func.func @transform_7(%arg0: i32) -> (i32, i32) {
    %c0_i32 = arith.constant 0 : i32
    %c0_i32_0 = arith.constant 0 : i32
    return %arg0, %c0_i32 : i32, i32
  }
}

</mosaic_0001>

<llo_original>
// kernel: tpu_custom_call.1
$region0: #{tpu_custom_call.1}
  #allocation0 [shape = 'u32[]', space=smem, size = 0x4, offset = 0x4, fixed_abs, tag = 'smem constant byte address 0x4 - core index']
  #allocation1 [shape = 'u32[144,128]{1,0:T(1,128)}', space=vmem, size = 0x12000, scoped, tag = 'internal scratch']
  %s0 = inlined_call_operand.vmem [shape: f32[8,32], index: 0, kind: input, shape index: {}]
  %s1 = inlined_call_operand.vmem [shape: bf16[32,128], index: 1, kind: input, shape index: {}]
  %s2 = inlined_call_operand.vmem [shape: f32[1,128], index: 2, kind: input, shape index: {}]
  %s3 = inlined_call_operand.vmem [shape: bf16[128,64], index: 3, kind: input, shape index: {}]
  %s4 = inlined_call_operand.vmem [shape: f32[1,64], index: 4, kind: input, shape index: {}]
  %s5 = inlined_call_operand.vmem [shape: bf16[64,128], index: 5, kind: input, shape index: {}]
  %s6 = inlined_call_operand.vmem [shape: f32[1,128], index: 6, kind: input, shape index: {}]
  %s7 = inlined_call_operand.hbm [shape: f32[8,128], index: 7, kind: output, shape index: {}]
  %s8 = sld [smem:[#allocation0]]
  $region38: #{tpu_custom_call.1} parent=0
    _
  %s10 = ssub.s32 1, %s8
  %s11 = scalar_select 0, %s10, %s8
  $region1: #{tpu_custom_call.1} parent=0
    #allocation2 [shape = 'u8[4096]{0}', space=vmem, size = 0x1000, scoped, tag = 'output window, operand 0, single buffered']
    #allocation3 [shape = 's32[1]{0}', space=sflag, size = 0x4, scoped, tag = 'scoped memory for tpu_custom_call.1']
    %12 = vsyncpa [#allocation3], 0
    // Predicated region
    $region2: #{tpu_custom_call.1} parent=1 // pred_check
      _
    $region3: #{tpu_custom_call.1} parent=1 // pred_check_branch
      %14 = sbr.rel (0) target = $region5
    $region4: #{tpu_custom_call.1} parent=1 // pred_region
      _
    $region5: #{tpu_custom_call.1} parent=1 // pred_fallthru
      _
    // Predicated region
    $region6: #{tpu_custom_call.1} parent=1 // pred_check
      _
    $region7: #{tpu_custom_call.1} parent=1 // pred_check_branch
      %16 = sbr.rel (0) target = $region9
    $region8: #{tpu_custom_call.1} parent=1 // pred_region
      _
    $region9: #{tpu_custom_call.1} parent=1 // pred_fallthru
      _
    // Predicated region
    $region10: #{tpu_custom_call.1} parent=1 // pred_check
      _
    $region11: #{tpu_custom_call.1} parent=1 // pred_check_branch
      %18 = sbr.rel (0) target = $region13
    $region12: #{tpu_custom_call.1} parent=1 // pred_region
      _
    $region13: #{tpu_custom_call.1} parent=1 // pred_fallthru
      _
    // Predicated region
    $region14: #{tpu_custom_call.1} parent=1 // pred_check
      _
    $region15: #{tpu_custom_call.1} parent=1 // pred_check_branch
      %20 = sbr.rel (0) target = $region17
    $region16: #{tpu_custom_call.1} parent=1 // pred_region
      _
    $region17: #{tpu_custom_call.1} parent=1 // pred_fallthru
      _
    // Predicated region
    $region18: #{tpu_custom_call.1} parent=1 // pred_check
      _
    $region19: #{tpu_custom_call.1} parent=1 // pred_check_branch
      %22 = sbr.rel (0) target = $region21
    $region20: #{tpu_custom_call.1} parent=1 // pred_region
      _
    $region21: #{tpu_custom_call.1} parent=1 // pred_fallthru
      _
    // Predicated region
    $region22: #{tpu_custom_call.1} parent=1 // pred_check
      _
    $region23: #{tpu_custom_call.1} parent=1 // pred_check_branch
      %24 = sbr.rel (0) target = $region25
    $region24: #{tpu_custom_call.1} parent=1 // pred_region
      _
    $region25: #{tpu_custom_call.1} parent=1 // pred_fallthru
      _
    // Predicated region
    $region26: #{tpu_custom_call.1} parent=1 // pred_check
      _
    $region27: #{tpu_custom_call.1} parent=1 // pred_check_branch
      %26 = sbr.rel (0) target = $region29
    $region28: #{tpu_custom_call.1} parent=1 // pred_region
      _
    $region29: #{tpu_custom_call.1} parent=1 // pred_fallthru
      _
    %v28 = vld [vmem:[%s0] sm:$0xff]
    %v29 = vpack.c.bf16 %v28, %v28
    %v30 = vld [vmem:[%s1] sm:$0xf]
    %v31 = vld [vmem:[%s1 + $0x4] sm:$0xf]
    %v32 = vld [vmem:[%s1 + $0x8] sm:$0xf]
    %v33 = vld [vmem:[%s1 + $0xc] sm:$0xf]
    %v34 = vld [vmem:[%s2] sm:$0x1]
    %v36 = vlaneseq
    %v37 = vshrl.u32 %v36, 7
    %v38 = vsub.s32 0, %v37
    %v39 = vrot.slane %v34, %v38
    %v45 = vunpack.c.l.b16 %v30
    %v46 = vunpack.c.l.b16 %v31
    %v47 = vunpack.c.l.b16 %v32
    %v48 = vunpack.c.l.b16 %v33
    %v49 = vpack.c.b16 %v46, %v45
    %v50 = vpack.c.b16 %v48, %v47
    %vm53 = vcmask 261120
    %v55 = vsel %vm53, %v29, 0
    %57 = vmatprep.subr.bf16.mxu0 0
    %58 = vmatpush1.bf16.msra.mxu0 %v49
    %59 = vmatprep.subr.bf16.mxu0 0
    %60 = vmatpush1.bf16.msra.mxu0 %v50
    %61 = vmatprep.subr.bf16.mxu0 0
    %62 = vmatpush1.bf16.msra.mxu0 0
    %63 = vmatprep.subr.bf16.mxu0 0
    %64 = vmatpush1.bf16.msra.mxu0 0
    %65 = vmatprep.subr.bf16.mxu0 0
    %66 = vmatpush1.bf16.msra.mxu0 0
    %67 = vmatprep.subr.bf16.mxu0 0
    %68 = vmatpush1.bf16.msra.mxu0 0
    %69 = vmatprep.subr.bf16.mxu0 0
    %70 = vmatpush1.bf16.msra.mxu0 0
    %71 = vmatprep.subr.bf16.mxu0 0
    %72 = vmatpush1.bf16.msra.mxu0 0
    %73 = vmatprep.subr.bf16.mxu0 0
    %74 = vmatpush1.bf16.msra.mxu0 0
    %75 = vmatprep.subr.bf16.mxu0 0
    %76 = vmatpush1.bf16.msra.mxu0 0
    %77 = vmatprep.subr.bf16.mxu0 0
    %78 = vmatpush1.bf16.msra.mxu0 0
    %79 = vmatprep.subr.bf16.mxu0 0
    %80 = vmatpush1.bf16.msra.mxu0 0
    %81 = vmatprep.subr.bf16.mxu0 0
    %82 = vmatpush1.bf16.msra.mxu0 0
    %83 = vmatprep.subr.bf16.mxu0 0
    %84 = vmatpush1.bf16.msra.mxu0 0
    %85 = vmatprep.subr.bf16.mxu0 0
    %86 = vmatpush1.bf16.msra.mxu0 0
    %87 = vmatprep.subr.bf16.mxu0 0
    %88 = vmatpush1.bf16.msra.mxu0 0
    %89 = vmatprep.mubr.bf16.mxu0 0
    %90 = vmatmul.mubr.bf16.gmra.mrb[0].mxu0 %v55
    %v91 = vpop.f32.mrb[0].mxu0
    %v92 = vadd.f32 %v39, %v91
    %v93 = vpop.f32.mrb[0].mxu0
    %v94 = vpop.f32.mrb[0].mxu0
    %v95 = vpop.f32.mrb[0].mxu0
    %96 = vdwg.mxu0
    %v97 = vmax.f32 %v92, 0.0
    %v98 = vpack.c.bf16 %v97, %v97
    %v99 = vld [vmem:[%s3] sm:$0xf]
    %v100 = vld [vmem:[%s3 + $0x4] sm:$0xf]
    %v101 = vld [vmem:[%s3 + $0x8] sm:$0xf]
    %v102 = vld [vmem:[%s3 + $0xc] sm:$0xf]
    %v103 = vld [vmem:[%s3 + $0x10] sm:$0xf]
    %v104 = vld [vmem:[%s3 + $0x14] sm:$0xf]
    %v105 = vld [vmem:[%s3 + $0x18] sm:$0xf]
    %v106 = vld [vmem:[%s3 + $0x1c] sm:$0xf]
    %v107 = vld [vmem:[%s3 + $0x20] sm:$0xf]
    %v108 = vld [vmem:[%s3 + $0x24] sm:$0xf]
    %v109 = vld [vmem:[%s3 + $0x28] sm:$0xf]
    %v110 = vld [vmem:[%s3 + $0x2c] sm:$0xf]
    %v111 = vld [vmem:[%s3 + $0x30] sm:$0xf]
    %v112 = vld [vmem:[%s3 + $0x34] sm:$0xf]
    %v113 = vld [vmem:[%s3 + $0x38] sm:$0xf]
    %v114 = vld [vmem:[%s3 + $0x3c] sm:$0xf]
    %v115 = vld [vmem:[%s4] sm:$0x1]
    %v117 = vlaneseq
    %v118 = vshrl.u32 %v117, 7
    %v119 = vsub.s32 0, %v118
    %v120 = vrot.slane %v115, %v119
    %v138 = vunpack.c.l.b16 %v99
    %v139 = vunpack.c.l.b16 %v100
    %v140 = vunpack.c.l.b16 %v101
    %v141 = vunpack.c.l.b16 %v102
    %v142 = vunpack.c.l.b16 %v103
    %v143 = vunpack.c.l.b16 %v104
    %v144 = vunpack.c.l.b16 %v105
    %v145 = vunpack.c.l.b16 %v106
    %v146 = vunpack.c.l.b16 %v107
    %v147 = vunpack.c.l.b16 %v108
    %v148 = vunpack.c.l.b16 %v109
    %v149 = vunpack.c.l.b16 %v110
    %v150 = vunpack.c.l.b16 %v111
    %v151 = vunpack.c.l.b16 %v112
    %v152 = vunpack.c.l.b16 %v113
    %v153 = vunpack.c.l.b16 %v114
    %v154 = vpack.c.b16 %v139, %v138
    %v155 = vpack.c.b16 %v141, %v140
    %v156 = vpack.c.b16 %v143, %v142
    %v157 = vpack.c.b16 %v145, %v144
    %v158 = vpack.c.b16 %v147, %v146
    %v159 = vpack.c.b16 %v149, %v148
    %v160 = vpack.c.b16 %v151, %v150
    %v161 = vpack.c.b16 %v153, %v152
    %170 = vmatprep.subr.bf16.mxu0 0
    %171 = vmatpush1.bf16.msra.mxu0 %v154
    %172 = vmatprep.subr.bf16.mxu0 0
    %173 = vmatpush1.bf16.msra.mxu0 %v155
    %174 = vmatprep.subr.bf16.mxu0 0
    %175 = vmatpush1.bf16.msra.mxu0 %v156
    %176 = vmatprep.subr.bf16.mxu0 0
    %177 = vmatpush1.bf16.msra.mxu0 %v157
    %178 = vmatprep.subr.bf16.mxu0 0
    %179 = vmatpush1.bf16.msra.mxu0 %v158
    %180 = vmatprep.subr.bf16.mxu0 0
    %181 = vmatpush1.bf16.msra.mxu0 %v159
    %182 = vmatprep.subr.bf16.mxu0 0
    %183 = vmatpush1.bf16.msra.mxu0 %v160
    %184 = vmatprep.subr.bf16.mxu0 0
    %185 = vmatpush1.bf16.msra.mxu0 %v161
    %186 = vmatprep.subr.bf16.mxu0 0
    %187 = vmatpush1.bf16.msra.mxu0 0
    %188 = vmatprep.subr.bf16.mxu0 0
    %189 = vmatpush1.bf16.msra.mxu0 0
    %190 = vmatprep.subr.bf16.mxu0 0
    %191 = vmatpush1.bf16.msra.mxu0 0
    %192 = vmatprep.subr.bf16.mxu0 0
    %193 = vmatpush1.bf16.msra.mxu0 0
    %194 = vmatprep.subr.bf16.mxu0 0
    %195 = vmatpush1.bf16.msra.mxu0 0
    %196 = vmatprep.subr.bf16.mxu0 0
    %197 = vmatpush1.bf16.msra.mxu0 0
    %198 = vmatprep.subr.bf16.mxu0 0
    %199 = vmatpush1.bf16.msra.mxu0 0
    %200 = vmatprep.subr.bf16.mxu0 0
    %201 = vmatpush1.bf16.msra.mxu0 0
    %202 = vmatprep.mubr.bf16.mxu0 0
    %203 = vmatmul.mubr.bf16.gmra.mrb[0].mxu0 %v98
    %v204 = vpop.f32.mrb[0].mxu0
    %v205 = vadd.f32 %v120, %v204
    %v206 = vpop.f32.mrb[0].mxu0
    %v207 = vpop.f32.mrb[0].mxu0
    %v208 = vpop.f32.mrb[0].mxu0
    %209 = vdwg.mxu0
    %v210 = vmax.f32 %v205, 0.0
    %v211 = vpack.c.bf16 %v210, %v210
    %v212 = vld [vmem:[%s5] sm:$0xf]
    %v213 = vld [vmem:[%s5 + $0x4] sm:$0xf]
    %v214 = vld [vmem:[%s5 + $0x8] sm:$0xf]
    %v215 = vld [vmem:[%s5 + $0xc] sm:$0xf]
    %v216 = vld [vmem:[%s5 + $0x10] sm:$0xf]
    %v217 = vld [vmem:[%s5 + $0x14] sm:$0xf]
    %v218 = vld [vmem:[%s5 + $0x18] sm:$0xf]
    %v219 = vld [vmem:[%s5 + $0x1c] sm:$0xf]
    %v220 = vld [vmem:[%s6] sm:$0x1]
    %v222 = vlaneseq
    %v223 = vshrl.u32 %v222, 7
    %v224 = vsub.s32 0, %v223
    %v225 = vrot.slane %v220, %v224
    %v235 = vunpack.c.l.b16 %v212
    %v236 = vunpack.c.l.b16 %v213
    %v237 = vunpack.c.l.b16 %v214
    %v238 = vunpack.c.l.b16 %v215
    %v239 = vunpack.c.l.b16 %v216
    %v240 = vunpack.c.l.b16 %v217
    %v241 = vunpack.c.l.b16 %v218
    %v242 = vunpack.c.l.b16 %v219
    %v243 = vpack.c.b16 %v236, %v235
    %v244 = vpack.c.b16 %v238, %v237
    %v245 = vpack.c.b16 %v240, %v239
    %v246 = vpack.c.b16 %v242, %v241
    %vm251 = vcmask 523264
    %v253 = vsel %vm251, %v211, 0
    %255 = vmatprep.subr.bf16.mxu0 0
    %256 = vmatpush1.bf16.msra.mxu0 %v243
    %257 = vmatprep.subr.bf16.mxu0 0
    %258 = vmatpush1.bf16.msra.mxu0 %v244
    %259 = vmatprep.subr.bf16.mxu0 0
    %260 = vmatpush1.bf16.msra.mxu0 %v245
    %261 = vmatprep.subr.bf16.mxu0 0
    %262 = vmatpush1.bf16.msra.mxu0 %v246
    %263 = vmatprep.subr.bf16.mxu0 0
    %264 = vmatpush1.bf16.msra.mxu0 0
    %265 = vmatprep.subr.bf16.mxu0 0
    %266 = vmatpush1.bf16.msra.mxu0 0
    %267 = vmatprep.subr.bf16.mxu0 0
    %268 = vmatpush1.bf16.msra.mxu0 0
    %269 = vmatprep.subr.bf16.mxu0 0
    %270 = vmatpush1.bf16.msra.mxu0 0
    %271 = vmatprep.subr.bf16.mxu0 0
    %272 = vmatpush1.bf16.msra.mxu0 0
    %273 = vmatprep.subr.bf16.mxu0 0
    %274 = vmatpush1.bf16.msra.mxu0 0
    %275 = vmatprep.subr.bf16.mxu0 0
    %276 = vmatpush1.bf16.msra.mxu0 0
    %277 = vmatprep.subr.bf16.mxu0 0
    %278 = vmatpush1.bf16.msra.mxu0 0
    %279 = vmatprep.subr.bf16.mxu0 0
    %280 = vmatpush1.bf16.msra.mxu0 0
    %281 = vmatprep.subr.bf16.mxu0 0
    %282 = vmatpush1.bf16.msra.mxu0 0
    %283 = vmatprep.subr.bf16.mxu0 0
    %284 = vmatpush1.bf16.msra.mxu0 0
    %285 = vmatprep.subr.bf16.mxu0 0
    %286 = vmatpush1.bf16.msra.mxu0 0
    %287 = vmatprep.mubr.bf16.mxu0 0
    %288 = vmatmul.mubr.bf16.gmra.mrb[0].mxu0 %v253
    %v289 = vpop.f32.mrb[0].mxu0
    %v290 = vadd.f32 %v225, %v289
    %v291 = vpop.f32.mrb[0].mxu0
    %v292 = vpop.f32.mrb[0].mxu0
    %v293 = vpop.f32.mrb[0].mxu0
    %294 = vdwg.mxu0
    %v295 = vtanh.pop %v290
    %296 = vst [vmem:[#allocation2] sm:$0xff] %v295
    // Predicated region
    $region30: #{tpu_custom_call.1} parent=1 // pred_check
      _
    $region31: #{tpu_custom_call.1} parent=1 // pred_check_branch
      %298 = sbr.rel (0) target = $region33
    $region32: #{tpu_custom_call.1} parent=1 // pred_region
      %s300 = ssub.s32 128, 128
      %301 = vsyncadd [#allocation3], %s300
      %s303 = sshll.u32 [#allocation2], 4
      %s304 = int_to_ptr.vmem [resolvable:$true] %s303
      %306 = dma.vmem_to_hbm [thread:$0]  %s304, 128, %s7, [#allocation3]
    $region33: #{tpu_custom_call.1} parent=1 // pred_fallthru
      _
    // Predicated region
    $region34: #{tpu_custom_call.1} parent=1 // pred_check
      _
    $region35: #{tpu_custom_call.1} parent=1 // pred_check_branch
      %308 = sbr.rel (0) target = $region37
    $region36: #{tpu_custom_call.1} parent=1 // pred_region
      %309 = dma.done [#allocation3], 128
    $region37: #{tpu_custom_call.1} parent=1 // pred_fallthru
      _
    %310 = vsyncpa [#allocation3], 1

</llo_original>
